<compile_context>
chip_gen: v7x
topology: tpu7x:2x2x1
jax: 0.10.0
libtpu: 0.0.40
codegen_flags: <defaults>
</compile_context>

<pallas_src>
import math

import jax
import jax.numpy as jnp
from jax.experimental import pallas as pl
from jax.experimental.pallas import tpu as pltpu

IN_DIM = 784
HID_DIM = 128
OUT_DIM = 1


def _discriminator_kernel(x_ref, w1_ref, b1_ref, w2_ref, b2_ref, o_ref):
    # fc1 + ReLU  (MXU matmul, f32 accumulate; hidden tile is (TM, 128), lane-aligned)
    x = x_ref[...]
    h = jnp.dot(x, w1_ref[...], preferred_element_type=jnp.float32) + b1_ref[...]
    h = jnp.maximum(h, 0.0)
    # fc2 + Sigmoid  (output is a single column -> tiny epilogue)
    z = jnp.dot(h, w2_ref[...], preferred_element_type=jnp.float32) + b2_ref[...]
    # exp lowers to the EUP; exact sigmoid keeps 1e-5 agreement with reference.
    o_ref[...] = (1.0 / (1.0 + jnp.exp(-z))).astype(o_ref.dtype)


def discriminator_forward(x, w1, b1, w2, b2, *, block_rows=1024):
    """x: (B, 784) f32. w1: (784,128), b1: (128,), w2: (128,1), b2: (1,).

    Returns sigmoid logits with size-1 dims squeezed (matches torch .squeeze()).
    """
    B = x.shape[0]
    # Batch tile: multiple of 8 sublanes, capped at block_rows and ~B.
    tm = min(block_rows, max(8, ((B + 7) // 8) * 8))
    grid = (pl.cdiv(B, tm),)

    b1_row = b1.reshape(1, HID_DIM)
    b2_row = b2.reshape(1, OUT_DIM)

    out = pl.pallas_call(
        _discriminator_kernel,
        out_shape=jax.ShapeDtypeStruct((B, OUT_DIM), jnp.float32),
        grid=grid,
        in_specs=[
            # x: tiled over batch
            pl.BlockSpec((tm, IN_DIM), lambda i: (i, 0)),
            # weights / biases: same block every step -> VMEM-resident
            pl.BlockSpec((IN_DIM, HID_DIM), lambda i: (0, 0)),
            pl.BlockSpec((1, HID_DIM), lambda i: (0, 0)),
            pl.BlockSpec((HID_DIM, OUT_DIM), lambda i: (0, 0)),
            pl.BlockSpec((1, OUT_DIM), lambda i: (0, 0)),
        ],
        out_specs=pl.BlockSpec((tm, OUT_DIM), lambda i: (i, 0)),
        compiler_params=pltpu.CompilerParams(
            dimension_semantics=("parallel",),
        ),
    )(x, w1, b1_row, w2, b2_row)

    # torch: x.squeeze() -> (B,) for B > 1, scalar for B == 1
    return jnp.squeeze(out)


def init_params(key):
    """Deterministic init matching nn.Linear defaults + xavier_uniform_ weights."""
    k1, k2, k3, k4 = jax.random.split(key, 4)

    # xavier_uniform_: U(-a, a), a = sqrt(6 / (fan_in + fan_out))
    a1 = math.sqrt(6.0 / (IN_DIM + HID_DIM))
    a2 = math.sqrt(6.0 / (HID_DIM + OUT_DIM))
    # stored transposed: (in_features, out_features)
    w1 = jax.random.uniform(k1, (IN_DIM, HID_DIM), jnp.float32, -a1, a1)
    w2 = jax.random.uniform(k2, (HID_DIM, OUT_DIM), jnp.float32, -a2, a2)

    # PyTorch Linear default bias init: U(-1/sqrt(fan_in), 1/sqrt(fan_in))
    bb1 = 1.0 / math.sqrt(IN_DIM)
    bb2 = 1.0 / math.sqrt(HID_DIM)
    b1 = jax.random.uniform(k3, (HID_DIM,), jnp.float32, -bb1, bb1)
    b2 = jax.random.uniform(k4, (OUT_DIM,), jnp.float32, -bb2, bb2)
    return w1, b1, w2, b2


def _reference(x, w1, b1, w2, b2):
    h = jnp.maximum(x @ w1 + b1, 0.0)
    z = h @ w2 + b2
    return jnp.squeeze(1.0 / (1.0 + jnp.exp(-z)))


if __name__ == "__main__":
    key = jax.random.PRNGKey(0)
    kx, kp = jax.random.split(key)

    batch = 16  # small test batch; kernel tiles up to 1024 rows for real batches
    x = jax.random.normal(kx, (batch, IN_DIM), jnp.float32)
    w1, b1, w2, b2 = init_params(kp)

    out = discriminator_forward(x, w1, b1, w2, b2)
    out = jax.block_until_ready(out)

    ref = _reference(x, w1, b1, w2, b2)
    assert out.shape == (batch,)
    assert jnp.allclose(out, ref, atol=1e-5, rtol=1e-5)

    print("KERNEL_OK")
</pallas_src>

<mosaic_0001>
module attributes {stable_mosaic.version = 11 : i64} {
  func.func @_discriminator_kernel(%arg0: i32, %arg1: memref<16x784xf32, #tpu.memory_space<vmem>>, %arg2: memref<784x128xf32, #tpu.memory_space<vmem>>, %arg3: memref<1x128xf32, #tpu.memory_space<vmem>>, %arg4: memref<128x1xf32, #tpu.memory_space<vmem>>, %arg5: memref<1x1xf32, #tpu.memory_space<vmem>>, %arg6: memref<16x1xf32, #tpu.memory_space<vmem>>) attributes {dimension_semantics = [#tpu.dimension_semantics<parallel>], iteration_bounds = array<i64: 1>, scalar_prefetch = 0 : i64, scratch_operands = 0 : i64, tpu.core_type = #tpu.core_type<tc>, window_params = [{transform_indices = @transform_0, window_bounds = array<i64: 16, 784>}, {pipeline_mode = #tpu.pipeline_mode<synchronous>, transform_indices = @transform_1, window_bounds = array<i64: 784, 128>}, {pipeline_mode = #tpu.pipeline_mode<synchronous>, transform_indices = @transform_2, window_bounds = array<i64: 1, 128>}, {pipeline_mode = #tpu.pipeline_mode<synchronous>, transform_indices = @transform_3, window_bounds = array<i64: 128, 1>}, {pipeline_mode = #tpu.pipeline_mode<synchronous>, transform_indices = @transform_4, window_bounds = array<i64: 1, 1>}, {transform_indices = @transform_5, window_bounds = array<i64: 16, 1>}]} {
    %c0 = arith.constant 0 : index
    %c0_0 = arith.constant 0 : index
    %0 = vector.load %arg1[%c0, %c0_0] : memref<16x784xf32, #tpu.memory_space<vmem>>, vector<16x784xf32>
    %c0_1 = arith.constant 0 : index
    %c0_2 = arith.constant 0 : index
    %1 = vector.load %arg2[%c0_1, %c0_2] : memref<784x128xf32, #tpu.memory_space<vmem>>, vector<784x128xf32>
    %cst = arith.constant dense<0.000000e+00> : vector<16x128xf32>
    %2 = tpu.matmul %0, %1, %cst {dimension_numbers = #tpu.dot_dimension_numbers<[1], [0], [0], [1], [0, 0, 1, 1], [], []>} : vector<16x784xf32>, vector<784x128xf32>, vector<16x128xf32> -> vector<16x128xf32>
    %c0_3 = arith.constant 0 : index
    %c0_4 = arith.constant 0 : index
    %3 = vector.load %arg3[%c0_3, %c0_4] : memref<1x128xf32, #tpu.memory_space<vmem>>, vector<1x128xf32>
    %4 = vector.broadcast %3 : vector<1x128xf32> to vector<16x128xf32>
    %5 = arith.addf %2, %4 : vector<16x128xf32>
    %cst_5 = arith.constant 0.000000e+00 : f32
    %6 = vector.broadcast %cst_5 : f32 to vector<16x128xf32>
    %7 = arith.maximumf %5, %6 : vector<16x128xf32>
    %c0_6 = arith.constant 0 : index
    %c0_7 = arith.constant 0 : index
    %8 = vector.load %arg4[%c0_6, %c0_7] : memref<128x1xf32, #tpu.memory_space<vmem>>, vector<128x1xf32>
    %cst_8 = arith.constant dense<0.000000e+00> : vector<16x1xf32>
    %9 = tpu.matmul %7, %8, %cst_8 {dimension_numbers = #tpu.dot_dimension_numbers<[1], [0], [0], [1], [0, 0, 1, 1], [], []>} : vector<16x128xf32>, vector<128x1xf32>, vector<16x1xf32> -> vector<16x1xf32>
    %c0_9 = arith.constant 0 : index
    %c0_10 = arith.constant 0 : index
    %10 = vector.load %arg5[%c0_9, %c0_10] : memref<1x1xf32, #tpu.memory_space<vmem>>, vector<1x1xf32>
    %11 = vector.broadcast %10 : vector<1x1xf32> to vector<16x1xf32>
    %12 = arith.addf %9, %11 : vector<16x1xf32>
    %cst_11 = arith.constant 0.000000e+00 : f32
    %13 = vector.broadcast %cst_11 : f32 to vector<16x1xf32>
    %14 = arith.subf %13, %12 : vector<16x1xf32>
    %15 = math.exp %14 : vector<16x1xf32>
    %cst_12 = arith.constant 1.000000e+00 : f32
    %16 = vector.broadcast %cst_12 : f32 to vector<16x1xf32>
    %17 = arith.addf %16, %15 : vector<16x1xf32>
    %cst_13 = arith.constant 1.000000e+00 : f32
    %18 = vector.broadcast %cst_13 : f32 to vector<16x1xf32>
    %19 = arith.divf %18, %17 : vector<16x1xf32>
    %c0_14 = arith.constant 0 : index
    %c0_15 = arith.constant 0 : index
    %20 = vector.load %arg6[%c0_14, %c0_15] : memref<16x1xf32, #tpu.memory_space<vmem>>, vector<16x1xf32>
    tpu.vector_store %arg6[%c0_14, %c0_15], %19 {strides = array<i32>} : memref<16x1xf32, #tpu.memory_space<vmem>>, vector<16x1xf32>,
    return
  }
  func.func @transform_0(%arg0: i32) -> (i32, i32) {
    %c0_i32 = arith.constant 0 : i32
    %c0_i32_0 = arith.constant 0 : i32
    return %arg0, %c0_i32 : i32, i32
  }
  func.func @transform_1(%arg0: i32) -> (i32, i32) {
    %c0_i32 = arith.constant 0 : i32
    %c0_i32_0 = arith.constant 0 : i32
    %c0_i32_1 = arith.constant 0 : i32
    return %c0_i32, %c0_i32_0 : i32, i32
  }
  func.func @transform_2(%arg0: i32) -> (i32, i32) {
    %c0_i32 = arith.constant 0 : i32
    %c0_i32_0 = arith.constant 0 : i32
    %c0_i32_1 = arith.constant 0 : i32
    return %c0_i32, %c0_i32_0 : i32, i32
  }
  func.func @transform_3(%arg0: i32) -> (i32, i32) {
    %c0_i32 = arith.constant 0 : i32
    %c0_i32_0 = arith.constant 0 : i32
    %c0_i32_1 = arith.constant 0 : i32
    return %c0_i32, %c0_i32_0 : i32, i32
  }
  func.func @transform_4(%arg0: i32) -> (i32, i32) {
    %c0_i32 = arith.constant 0 : i32
    %c0_i32_0 = arith.constant 0 : i32
    %c0_i32_1 = arith.constant 0 : i32
    return %c0_i32, %c0_i32_0 : i32, i32
  }
  func.func @transform_5(%arg0: i32) -> (i32, i32) {
    %c0_i32 = arith.constant 0 : i32
    %c0_i32_0 = arith.constant 0 : i32
    return %arg0, %c0_i32 : i32, i32
  }
}

</mosaic_0001>

<llo_original>
// kernel: tpu_custom_call.1
$region0: #{tpu_custom_call.1}
  #allocation0 [shape = 'u32[]', space=smem, size = 0x4, offset = 0x4, fixed_abs, tag = 'smem constant byte address 0x4 - core index']
  #allocation1 [shape = 'u32[144,128]{1,0:T(1,128)}', space=vmem, size = 0x12000, scoped, tag = 'internal scratch']
  #allocation2 [shape = 'f32[1,1]{1,0:T(1,128)S(1)}', space=vmem, size = 0x200, scoped, tag = 'scoped memory for tpu_custom_call.1']
  %s0 = inlined_call_operand.vmem [shape: f32[16,784], index: 0, kind: input, shape index: {}]
  %s1 = inlined_call_operand.hbm [shape: f32[784,128], index: 1, kind: input, shape index: {}]
  %s2 = inlined_call_operand.vmem [shape: f32[1,128], index: 2, kind: input, shape index: {}]
  %s3 = inlined_call_operand.vmem [shape: f32[128,1], index: 3, kind: input, shape index: {}]
  %s4 = inlined_call_operand.<no memory space> [shape: f32[1,1], index: 4, kind: input, shape index: {}]
  %s5 = inlined_call_operand.vmem [shape: f32[16,1], index: 5, kind: output, shape index: {}]
  %s6 = sld [smem:[#allocation0]]
  $region34: #{tpu_custom_call.1} parent=0
    _
  %s8 = ssub.s32 1, %s6
  %s9 = scalar_select 0, %s8, %s6
  %v10 = vstv %s4
  %11 = vst [vmem:[#allocation2] sm:$0x1] %v10
  $region1: #{tpu_custom_call.1} parent=0
    #allocation3 [shape = 'u8[401408]{0}', space=vmem, size = 0x62000, scoped, tag = 'input window, operand 1, single buffered']
    #allocation4 [shape = 's32[1]{0}', space=sflag, size = 0x4, scoped, tag = 'scoped memory for tpu_custom_call.1']
    %12 = vsyncpa [#allocation4], 0
    // Predicated region
    $region2: #{tpu_custom_call.1} parent=1 // pred_check
      _
    $region3: #{tpu_custom_call.1} parent=1 // pred_check_branch
      %14 = sbr.rel (0) target = $region5
    $region4: #{tpu_custom_call.1} parent=1 // pred_region
      _
    $region5: #{tpu_custom_call.1} parent=1 // pred_fallthru
      _
    // Predicated region
    $region6: #{tpu_custom_call.1} parent=1 // pred_check
      _
    $region7: #{tpu_custom_call.1} parent=1 // pred_check_branch
      %16 = sbr.rel (0) target = $region9
    $region8: #{tpu_custom_call.1} parent=1 // pred_region
      %s18 = ssub.s32 12544, 12544
      %19 = vsyncadd [#allocation4], %s18
      %s20 = sshll.u32 [#allocation3], 4
      %s21 = int_to_ptr.vmem [resolvable:$true] %s20
      %26 = dma.hbm_to_vmem [thread:$0]  %s1, 12544, %s21, [#allocation4], 128, 128, 8
    $region9: #{tpu_custom_call.1} parent=1 // pred_fallthru
      _
    // Predicated region
    $region10: #{tpu_custom_call.1} parent=1 // pred_check
      _
    $region11: #{tpu_custom_call.1} parent=1 // pred_check_branch
      %28 = sbr.rel (0) target = $region13
    $region12: #{tpu_custom_call.1} parent=1 // pred_region
      _
    $region13: #{tpu_custom_call.1} parent=1 // pred_fallthru
      _
    // Predicated region
    $region14: #{tpu_custom_call.1} parent=1 // pred_check
      _
    $region15: #{tpu_custom_call.1} parent=1 // pred_check_branch
      %30 = sbr.rel (0) target = $region17
    $region16: #{tpu_custom_call.1} parent=1 // pred_region
      _
    $region17: #{tpu_custom_call.1} parent=1 // pred_fallthru
      _
    // Predicated region
    $region18: #{tpu_custom_call.1} parent=1 // pred_check
      _
    $region19: #{tpu_custom_call.1} parent=1 // pred_check_branch
      %32 = sbr.rel (0) target = $region21
    $region20: #{tpu_custom_call.1} parent=1 // pred_region
      _
    $region21: #{tpu_custom_call.1} parent=1 // pred_fallthru
      _
    // Predicated region
    $region22: #{tpu_custom_call.1} parent=1 // pred_check
      _
    $region23: #{tpu_custom_call.1} parent=1 // pred_check_branch
      %34 = sbr.rel (0) target = $region25
    $region24: #{tpu_custom_call.1} parent=1 // pred_region
      %35 = dma.done [#allocation4], 12544
    $region25: #{tpu_custom_call.1} parent=1 // pred_fallthru
      _
    %v36 = vld [vmem:[%s0] sm:$0xff]
    %v37 = vld [vmem:[%s0 + $0x8] sm:$0xff]
    %v38 = vld [vmem:[%s0 + $0x10] sm:$0xff]
    %v39 = vld [vmem:[%s0 + $0x18] sm:$0xff]
    %v40 = vld [vmem:[%s0 + $0x20] sm:$0xff]
    %v41 = vld [vmem:[%s0 + $0x28] sm:$0xff]
    %v42 = vld [vmem:[%s0 + $0x30] sm:$0xff]
    %v43 = vld [vmem:[%s0 + $0x38] sm:$0xff]
    %v44 = vld [vmem:[%s0 + $0x40] sm:$0xff]
    %v45 = vld [vmem:[%s0 + $0x48] sm:$0xff]
    %v46 = vld [vmem:[%s0 + $0x50] sm:$0xff]
    %v47 = vld [vmem:[%s0 + $0x58] sm:$0xff]
    %v48 = vld [vmem:[%s0 + $0x60] sm:$0xff]
    %v49 = vld [vmem:[%s0 + $0x68] sm:$0xff]
    %v50 = vld [vmem:[#allocation3] sm:$0xff]
    %v51 = vld [vmem:[#allocation3 + $0x8] sm:$0xff]
    %v52 = vld [vmem:[#allocation3 + $0x10] sm:$0xff]
    %v53 = vld [vmem:[#allocation3 + $0x18] sm:$0xff]
    %v54 = vld [vmem:[#allocation3 + $0x20] sm:$0xff]
    %v55 = vld [vmem:[#allocation3 + $0x28] sm:$0xff]
    %v56 = vld [vmem:[#allocation3 + $0x30] sm:$0xff]
    %v57 = vld [vmem:[#allocation3 + $0x38] sm:$0xff]
    %v58 = vld [vmem:[#allocation3 + $0x40] sm:$0xff]
    %v59 = vld [vmem:[#allocation3 + $0x48] sm:$0xff]
    %v60 = vld [vmem:[#allocation3 + $0x50] sm:$0xff]
    %v61 = vld [vmem:[#allocation3 + $0x58] sm:$0xff]
    %v62 = vld [vmem:[#allocation3 + $0x60] sm:$0xff]
    %v63 = vld [vmem:[#allocation3 + $0x68] sm:$0xff]
    %v64 = vld [vmem:[#allocation3 + $0x70] sm:$0xff]
    %v65 = vld [vmem:[#allocation3 + $0x78] sm:$0xff]
    %v66 = vld [vmem:[#allocation3 + $0x80] sm:$0xff]
    %v67 = vld [vmem:[#allocation3 + $0x88] sm:$0xff]
    %v68 = vld [vmem:[#allocation3 + $0x90] sm:$0xff]
    %v69 = vld [vmem:[#allocation3 + $0x98] sm:$0xff]
    %v70 = vld [vmem:[#allocation3 + $0xa0] sm:$0xff]
    %v71 = vld [vmem:[#allocation3 + $0xa8] sm:$0xff]
    %v72 = vld [vmem:[#allocation3 + $0xb0] sm:$0xff]
    %v73 = vld [vmem:[#allocation3 + $0xb8] sm:$0xff]
    %v74 = vld [vmem:[#allocation3 + $0xc0] sm:$0xff]
    %v75 = vld [vmem:[#allocation3 + $0xc8] sm:$0xff]
    %v76 = vld [vmem:[#allocation3 + $0xd0] sm:$0xff]
    %v77 = vld [vmem:[#allocation3 + $0xd8] sm:$0xff]
    %v78 = vld [vmem:[#allocation3 + $0xe0] sm:$0xff]
    %v79 = vld [vmem:[#allocation3 + $0xe8] sm:$0xff]
    %v80 = vld [vmem:[#allocation3 + $0xf0] sm:$0xff]
    %v81 = vld [vmem:[#allocation3 + $0xf8] sm:$0xff]
    %v82 = vld [vmem:[#allocation3 + $0x100] sm:$0xff]
    %v83 = vld [vmem:[#allocation3 + $0x108] sm:$0xff]
    %v84 = vld [vmem:[#allocation3 + $0x110] sm:$0xff]
    %v85 = vld [vmem:[#allocation3 + $0x118] sm:$0xff]
    %v86 = vld [vmem:[#allocation3 + $0x120] sm:$0xff]
    %v87 = vld [vmem:[#allocation3 + $0x128] sm:$0xff]
    %v88 = vld [vmem:[#allocation3 + $0x130] sm:$0xff]
    %v89 = vld [vmem:[#allocation3 + $0x138] sm:$0xff]
    %v90 = vld [vmem:[#allocation3 + $0x140] sm:$0xff]
    %v91 = vld [vmem:[#allocation3 + $0x148] sm:$0xff]
    %v92 = vld [vmem:[#allocation3 + $0x150] sm:$0xff]
    %v93 = vld [vmem:[#allocation3 + $0x158] sm:$0xff]
    %v94 = vld [vmem:[#allocation3 + $0x160] sm:$0xff]
    %v95 = vld [vmem:[#allocation3 + $0x168] sm:$0xff]
    %v96 = vld [vmem:[#allocation3 + $0x170] sm:$0xff]
    %v97 = vld [vmem:[#allocation3 + $0x178] sm:$0xff]
    %v98 = vld [vmem:[#allocation3 + $0x180] sm:$0xff]
    %v99 = vld [vmem:[#allocation3 + $0x188] sm:$0xff]
    %v100 = vld [vmem:[#allocation3 + $0x190] sm:$0xff]
    %v101 = vld [vmem:[#allocation3 + $0x198] sm:$0xff]
    %v102 = vld [vmem:[#allocation3 + $0x1a0] sm:$0xff]
    %v103 = vld [vmem:[#allocation3 + $0x1a8] sm:$0xff]
    %v104 = vld [vmem:[#allocation3 + $0x1b0] sm:$0xff]
    %v105 = vld [vmem:[#allocation3 + $0x1b8] sm:$0xff]
    %v106 = vld [vmem:[#allocation3 + $0x1c0] sm:$0xff]
    %v107 = vld [vmem:[#allocation3 + $0x1c8] sm:$0xff]
    %v108 = vld [vmem:[#allocation3 + $0x1d0] sm:$0xff]
    %v109 = vld [vmem:[#allocation3 + $0x1d8] sm:$0xff]
    %v110 = vld [vmem:[#allocation3 + $0x1e0] sm:$0xff]
    %v111 = vld [vmem:[#allocation3 + $0x1e8] sm:$0xff]
    %v112 = vld [vmem:[#allocation3 + $0x1f0] sm:$0xff]
    %v113 = vld [vmem:[#allocation3 + $0x1f8] sm:$0xff]
    %v114 = vld [vmem:[#allocation3 + $0x200] sm:$0xff]
    %v115 = vld [vmem:[#allocation3 + $0x208] sm:$0xff]
    %v116 = vld [vmem:[#allocation3 + $0x210] sm:$0xff]
    %v117 = vld [vmem:[#allocation3 + $0x218] sm:$0xff]
    %v118 = vld [vmem:[#allocation3 + $0x220] sm:$0xff]
    %v119 = vld [vmem:[#allocation3 + $0x228] sm:$0xff]
    %v120 = vld [vmem:[#allocation3 + $0x230] sm:$0xff]
    %v121 = vld [vmem:[#allocation3 + $0x238] sm:$0xff]
    %v122 = vld [vmem:[#allocation3 + $0x240] sm:$0xff]
    %v123 = vld [vmem:[#allocation3 + $0x248] sm:$0xff]
    %v124 = vld [vmem:[#allocation3 + $0x250] sm:$0xff]
    %v125 = vld [vmem:[#allocation3 + $0x258] sm:$0xff]
    %v126 = vld [vmem:[#allocation3 + $0x260] sm:$0xff]
    %v127 = vld [vmem:[#allocation3 + $0x268] sm:$0xff]
    %v128 = vld [vmem:[#allocation3 + $0x270] sm:$0xff]
    %v129 = vld [vmem:[#allocation3 + $0x278] sm:$0xff]
    %v130 = vld [vmem:[#allocation3 + $0x280] sm:$0xff]
    %v131 = vld [vmem:[#allocation3 + $0x288] sm:$0xff]
    %v132 = vld [vmem:[#allocation3 + $0x290] sm:$0xff]
    %v133 = vld [vmem:[#allocation3 + $0x298] sm:$0xff]
    %v134 = vld [vmem:[#allocation3 + $0x2a0] sm:$0xff]
    %v135 = vld [vmem:[#allocation3 + $0x2a8] sm:$0xff]
    %v136 = vld [vmem:[#allocation3 + $0x2b0] sm:$0xff]
    %v137 = vld [vmem:[#allocation3 + $0x2b8] sm:$0xff]
    %v138 = vld [vmem:[#allocation3 + $0x2c0] sm:$0xff]
    %v139 = vld [vmem:[#allocation3 + $0x2c8] sm:$0xff]
    %v140 = vld [vmem:[#allocation3 + $0x2d0] sm:$0xff]
    %v141 = vld [vmem:[#allocation3 + $0x2d8] sm:$0xff]
    %v142 = vld [vmem:[#allocation3 + $0x2e0] sm:$0xff]
    %v143 = vld [vmem:[#allocation3 + $0x2e8] sm:$0xff]
    %v144 = vld [vmem:[#allocation3 + $0x2f0] sm:$0xff]
    %v145 = vld [vmem:[#allocation3 + $0x2f8] sm:$0xff]
    %v146 = vld [vmem:[#allocation3 + $0x300] sm:$0xff]
    %v147 = vld [vmem:[#allocation3 + $0x308] sm:$0xff]
    %v148 = vld [vmem:[%s2] sm:$0x1]
    %v150 = vlaneseq
    %v151 = vshrl.u32 %v150, 7
    %v152 = vsub.s32 0, %v151
    %v153 = vrot.slane %v148, %v152
    %vm155 = vcmask 130048
    %v157 = vsel %vm155, %v42, 0
    %v160 = vsel %vm155, %v49, 0
    %162 = vmatprep.subr.mxu0 0.0
    %163 = vmatpush1.msra.mxu0 %v50
    %164 = vmatprep.subr.mxu0 0.0
    %165 = vmatpush1.msra.mxu0 %v51
    %166 = vmatprep.subr.mxu0 0.0
    %167 = vmatpush1.msra.mxu0 %v52
    %168 = vmatprep.subr.mxu0 0.0
    %169 = vmatpush1.msra.mxu0 %v53
    %170 = vmatprep.subr.mxu0 0.0
    %171 = vmatpush1.msra.mxu0 %v54
    %172 = vmatprep.subr.mxu0 0.0
    %173 = vmatpush1.msra.mxu0 %v55
    %174 = vmatprep.subr.mxu0 0.0
    %175 = vmatpush1.msra.mxu0 %v56
    %176 = vmatprep.subr.mxu0 0.0
    %177 = vmatpush1.msra.mxu0 %v57
    %178 = vmatprep.subr.mxu0 0.0
    %179 = vmatpush1.msra.mxu0 %v58
    %180 = vmatprep.subr.mxu0 0.0
    %181 = vmatpush1.msra.mxu0 %v59
    %182 = vmatprep.subr.mxu0 0.0
    %183 = vmatpush1.msra.mxu0 %v60
    %184 = vmatprep.subr.mxu0 0.0
    %185 = vmatpush1.msra.mxu0 %v61
    %186 = vmatprep.subr.mxu0 0.0
    %187 = vmatpush1.msra.mxu0 %v62
    %188 = vmatprep.subr.mxu0 0.0
    %189 = vmatpush1.msra.mxu0 %v63
    %190 = vmatprep.subr.mxu0 0.0
    %191 = vmatpush1.msra.mxu0 %v64
    %192 = vmatprep.subr.mxu0 0.0
    %193 = vmatpush1.msra.mxu0 %v65
    %194 = vmatprep.subr.mxu0 0.0
    %195 = vmatpush1.msra.mxu0 %v66
    %196 = vmatprep.subr.mxu0 0.0
    %197 = vmatpush1.msra.mxu0 %v67
    %198 = vmatprep.subr.mxu0 0.0
    %199 = vmatpush1.msra.mxu0 %v68
    %200 = vmatprep.subr.mxu0 0.0
    %201 = vmatpush1.msra.mxu0 %v69
    %202 = vmatprep.subr.mxu0 0.0
    %203 = vmatpush1.msra.mxu0 %v70
    %204 = vmatprep.subr.mxu0 0.0
    %205 = vmatpush1.msra.mxu0 %v71
    %206 = vmatprep.subr.mxu0 0.0
    %207 = vmatpush1.msra.mxu0 %v72
    %208 = vmatprep.subr.mxu0 0.0
    %209 = vmatpush1.msra.mxu0 %v73
    %210 = vmatprep.subr.mxu0 0.0
    %211 = vmatpush1.msra.mxu0 %v74
    %212 = vmatprep.subr.mxu0 0.0
    %213 = vmatpush1.msra.mxu0 %v75
    %214 = vmatprep.subr.mxu0 0.0
    %215 = vmatpush1.msra.mxu0 %v76
    %216 = vmatprep.subr.mxu0 0.0
    %217 = vmatpush1.msra.mxu0 %v77
    %218 = vmatprep.subr.mxu0 0.0
    %219 = vmatpush1.msra.mxu0 %v78
    %220 = vmatprep.subr.mxu0 0.0
    %221 = vmatpush1.msra.mxu0 %v79
    %222 = vmatprep.subr.mxu0 0.0
    %223 = vmatpush1.msra.mxu0 %v80
    %224 = vmatprep.subr.mxu0 0.0
    %225 = vmatpush1.msra.mxu0 %v81
    %226 = vmatprep.mubr.f32.mxu0 %v37
    %227 = vmatmul.mubr.f32.gmra.mrb[0].mxu0 %v36
    %v228 = vpop.f32.mrb[0].mxu0
    %v229 = vadd.f32 %v153, %v228
    %v230 = vpop.f32.mrb[0].mxu0
    %231 = vmatprep.mubr.f32.mxu0 %v44
    %232 = vmatmul.mubr.f32.gmra.mrb[0].mxu0 %v43
    %v233 = vpop.f32.mrb[0].mxu0
    %v234 = vadd.f32 %v153, %v233
    %v235 = vpop.f32.mrb[0].mxu0
    %236 = vdwg.mxu0
    %237 = vmatprep.subr.mxu0 0.0
    %238 = vmatpush1.msra.mxu0 %v82
    %239 = vmatprep.subr.mxu0 0.0
    %240 = vmatpush1.msra.mxu0 %v83
    %241 = vmatprep.subr.mxu0 0.0
    %242 = vmatpush1.msra.mxu0 %v84
    %243 = vmatprep.subr.mxu0 0.0
    %244 = vmatpush1.msra.mxu0 %v85
    %245 = vmatprep.subr.mxu0 0.0
    %246 = vmatpush1.msra.mxu0 %v86
    %247 = vmatprep.subr.mxu0 0.0
    %248 = vmatpush1.msra.mxu0 %v87
    %249 = vmatprep.subr.mxu0 0.0
    %250 = vmatpush1.msra.mxu0 %v88
    %251 = vmatprep.subr.mxu0 0.0
    %252 = vmatpush1.msra.mxu0 %v89
    %253 = vmatprep.subr.mxu0 0.0
    %254 = vmatpush1.msra.mxu0 %v90
    %255 = vmatprep.subr.mxu0 0.0
    %256 = vmatpush1.msra.mxu0 %v91
    %257 = vmatprep.subr.mxu0 0.0
    %258 = vmatpush1.msra.mxu0 %v92
    %259 = vmatprep.subr.mxu0 0.0
    %260 = vmatpush1.msra.mxu0 %v93
    %261 = vmatprep.subr.mxu0 0.0
    %262 = vmatpush1.msra.mxu0 %v94
    %263 = vmatprep.subr.mxu0 0.0
    %264 = vmatpush1.msra.mxu0 %v95
    %265 = vmatprep.subr.mxu0 0.0
    %266 = vmatpush1.msra.mxu0 %v96
    %267 = vmatprep.subr.mxu0 0.0
    %268 = vmatpush1.msra.mxu0 %v97
    %269 = vmatprep.subr.mxu0 0.0
    %270 = vmatpush1.msra.mxu0 %v98
    %271 = vmatprep.subr.mxu0 0.0
    %272 = vmatpush1.msra.mxu0 %v99
    %273 = vmatprep.subr.mxu0 0.0
    %274 = vmatpush1.msra.mxu0 %v100
    %275 = vmatprep.subr.mxu0 0.0
    %276 = vmatpush1.msra.mxu0 %v101
    %277 = vmatprep.subr.mxu0 0.0
    %278 = vmatpush1.msra.mxu0 %v102
    %279 = vmatprep.subr.mxu0 0.0
    %280 = vmatpush1.msra.mxu0 %v103
    %281 = vmatprep.subr.mxu0 0.0
    %282 = vmatpush1.msra.mxu0 %v104
    %283 = vmatprep.subr.mxu0 0.0
    %284 = vmatpush1.msra.mxu0 %v105
    %285 = vmatprep.subr.mxu0 0.0
    %286 = vmatpush1.msra.mxu0 %v106
    %287 = vmatprep.subr.mxu0 0.0
    %288 = vmatpush1.msra.mxu0 %v107
    %289 = vmatprep.subr.mxu0 0.0
    %290 = vmatpush1.msra.mxu0 %v108
    %291 = vmatprep.subr.mxu0 0.0
    %292 = vmatpush1.msra.mxu0 %v109
    %293 = vmatprep.subr.mxu0 0.0
    %294 = vmatpush1.msra.mxu0 %v110
    %295 = vmatprep.subr.mxu0 0.0
    %296 = vmatpush1.msra.mxu0 %v111
    %297 = vmatprep.subr.mxu0 0.0
    %298 = vmatpush1.msra.mxu0 %v112
    %299 = vmatprep.subr.mxu0 0.0
    %300 = vmatpush1.msra.mxu0 %v113
    %301 = vmatprep.mubr.f32.mxu0 %v39
    %302 = vmatmul.mubr.f32.gmra.mrb[0].mxu0 %v38
    %v303 = vpop.f32.mrb[0].mxu0
    %v304 = vadd.f32 %v229, %v303
    %v305 = vpop.f32.mrb[0].mxu0
    %306 = vmatprep.mubr.f32.mxu0 %v46
    %307 = vmatmul.mubr.f32.gmra.mrb[0].mxu0 %v45
    %v308 = vpop.f32.mrb[0].mxu0
    %v309 = vadd.f32 %v234, %v308
    %v310 = vpop.f32.mrb[0].mxu0
    %311 = vdwg.mxu0
    %312 = vmatprep.subr.mxu0 0.0
    %313 = vmatpush1.msra.mxu0 %v114
    %314 = vmatprep.subr.mxu0 0.0
    %315 = vmatpush1.msra.mxu0 %v115
    %316 = vmatprep.subr.mxu0 0.0
    %317 = vmatpush1.msra.mxu0 %v116
    %318 = vmatprep.subr.mxu0 0.0
    %319 = vmatpush1.msra.mxu0 %v117
    %320 = vmatprep.subr.mxu0 0.0
    %321 = vmatpush1.msra.mxu0 %v118
    %322 = vmatprep.subr.mxu0 0.0
    %323 = vmatpush1.msra.mxu0 %v119
    %324 = vmatprep.subr.mxu0 0.0
    %325 = vmatpush1.msra.mxu0 %v120
    %326 = vmatprep.subr.mxu0 0.0
    %327 = vmatpush1.msra.mxu0 %v121
    %328 = vmatprep.subr.mxu0 0.0
    %329 = vmatpush1.msra.mxu0 %v122
    %330 = vmatprep.subr.mxu0 0.0
    %331 = vmatpush1.msra.mxu0 %v123
    %332 = vmatprep.subr.mxu0 0.0
    %333 = vmatpush1.msra.mxu0 %v124
    %334 = vmatprep.subr.mxu0 0.0
    %335 = vmatpush1.msra.mxu0 %v125
    %336 = vmatprep.subr.mxu0 0.0
    %337 = vmatpush1.msra.mxu0 %v126
    %338 = vmatprep.subr.mxu0 0.0
    %339 = vmatpush1.msra.mxu0 %v127
    %340 = vmatprep.subr.mxu0 0.0
    %341 = vmatpush1.msra.mxu0 %v128
    %342 = vmatprep.subr.mxu0 0.0
    %343 = vmatpush1.msra.mxu0 %v129
    %344 = vmatprep.subr.mxu0 0.0
    %345 = vmatpush1.msra.mxu0 %v130
    %346 = vmatprep.subr.mxu0 0.0
    %347 = vmatpush1.msra.mxu0 %v131
    %348 = vmatprep.subr.mxu0 0.0
    %349 = vmatpush1.msra.mxu0 %v132
    %350 = vmatprep.subr.mxu0 0.0
    %351 = vmatpush1.msra.mxu0 %v133
    %352 = vmatprep.subr.mxu0 0.0
    %353 = vmatpush1.msra.mxu0 %v134
    %354 = vmatprep.subr.mxu0 0.0
    %355 = vmatpush1.msra.mxu0 %v135
    %356 = vmatprep.subr.mxu0 0.0
    %357 = vmatpush1.msra.mxu0 %v136
    %358 = vmatprep.subr.mxu0 0.0
    %359 = vmatpush1.msra.mxu0 %v137
    %360 = vmatprep.subr.mxu0 0.0
    %361 = vmatpush1.msra.mxu0 %v138
    %362 = vmatprep.subr.mxu0 0.0
    %363 = vmatpush1.msra.mxu0 %v139
    %364 = vmatprep.subr.mxu0 0.0
    %365 = vmatpush1.msra.mxu0 %v140
    %366 = vmatprep.subr.mxu0 0.0
    %367 = vmatpush1.msra.mxu0 %v141
    %368 = vmatprep.subr.mxu0 0.0
    %369 = vmatpush1.msra.mxu0 %v142
    %370 = vmatprep.subr.mxu0 0.0
    %371 = vmatpush1.msra.mxu0 %v143
    %372 = vmatprep.subr.mxu0 0.0
    %373 = vmatpush1.msra.mxu0 %v144
    %374 = vmatprep.subr.mxu0 0.0
    %375 = vmatpush1.msra.mxu0 %v145
    %376 = vmatprep.mubr.f32.mxu0 %v41
    %377 = vmatmul.mubr.f32.gmra.mrb[0].mxu0 %v40
    %v378 = vpop.f32.mrb[0].mxu0
    %v379 = vadd.f32 %v304, %v378
    %v380 = vpop.f32.mrb[0].mxu0
    %381 = vmatprep.mubr.f32.mxu0 %v48
    %382 = vmatmul.mubr.f32.gmra.mrb[0].mxu0 %v47
    %v383 = vpop.f32.mrb[0].mxu0
    %v384 = vadd.f32 %v309, %v383
    %v385 = vpop.f32.mrb[0].mxu0
    %386 = vdwg.mxu0
    %387 = vmatprep.subr.mxu0 0.0
    %388 = vmatpush1.msra.mxu0 %v146
    %389 = vmatprep.subr.mxu0 0.0
    %390 = vmatpush1.msra.mxu0 %v147
    %391 = vmatprep.subr.mxu0 0.0
    %392 = vmatpush1.msra.mxu0 0.0
    %393 = vmatprep.subr.mxu0 0.0
    %394 = vmatpush1.msra.mxu0 0.0
    %395 = vmatprep.subr.mxu0 0.0
    %396 = vmatpush1.msra.mxu0 0.0
    %397 = vmatprep.subr.mxu0 0.0
    %398 = vmatpush1.msra.mxu0 0.0
    %399 = vmatprep.subr.mxu0 0.0
    %400 = vmatpush1.msra.mxu0 0.0
    %401 = vmatprep.subr.mxu0 0.0
    %402 = vmatpush1.msra.mxu0 0.0
    %403 = vmatprep.subr.mxu0 0.0
    %404 = vmatpush1.msra.mxu0 0.0
    %405 = vmatprep.subr.mxu0 0.0
    %406 = vmatpush1.msra.mxu0 0.0
    %407 = vmatprep.subr.mxu0 0.0
    %408 = vmatpush1.msra.mxu0 0.0
    %409 = vmatprep.subr.mxu0 0.0
    %410 = vmatpush1.msra.mxu0 0.0
    %411 = vmatprep.subr.mxu0 0.0
    %412 = vmatpush1.msra.mxu0 0.0
    %413 = vmatprep.subr.mxu0 0.0
    %414 = vmatpush1.msra.mxu0 0.0
    %415 = vmatprep.subr.mxu0 0.0
    %416 = vmatpush1.msra.mxu0 0.0
    %417 = vmatprep.subr.mxu0 0.0
    %418 = vmatpush1.msra.mxu0 0.0
    %419 = vmatprep.subr.mxu0 0.0
    %420 = vmatpush1.msra.mxu0 0.0
    %421 = vmatprep.subr.mxu0 0.0
    %422 = vmatpush1.msra.mxu0 0.0
    %423 = vmatprep.subr.mxu0 0.0
    %424 = vmatpush1.msra.mxu0 0.0
    %425 = vmatprep.subr.mxu0 0.0
    %426 = vmatpush1.msra.mxu0 0.0
    %427 = vmatprep.subr.mxu0 0.0
    %428 = vmatpush1.msra.mxu0 0.0
    %429 = vmatprep.subr.mxu0 0.0
    %430 = vmatpush1.msra.mxu0 0.0
    %431 = vmatprep.subr.mxu0 0.0
    %432 = vmatpush1.msra.mxu0 0.0
    %433 = vmatprep.subr.mxu0 0.0
    %434 = vmatpush1.msra.mxu0 0.0
    %435 = vmatprep.subr.mxu0 0.0
    %436 = vmatpush1.msra.mxu0 0.0
    %437 = vmatprep.subr.mxu0 0.0
    %438 = vmatpush1.msra.mxu0 0.0
    %439 = vmatprep.subr.mxu0 0.0
    %440 = vmatpush1.msra.mxu0 0.0
    %441 = vmatprep.subr.mxu0 0.0
    %442 = vmatpush1.msra.mxu0 0.0
    %443 = vmatprep.subr.mxu0 0.0
    %444 = vmatpush1.msra.mxu0 0.0
    %445 = vmatprep.subr.mxu0 0.0
    %446 = vmatpush1.msra.mxu0 0.0
    %447 = vmatprep.subr.mxu0 0.0
    %448 = vmatpush1.msra.mxu0 0.0
    %449 = vmatprep.subr.mxu0 0.0
    %450 = vmatpush1.msra.mxu0 0.0
    %451 = vmatprep.mubr.f32.mxu0 0.0
    %452 = vmatmul.mubr.f32.gmra.mrb[0].mxu0 %v157
    %v453 = vpop.f32.mrb[0].mxu0
    %v454 = vadd.f32 %v379, %v453
    %v455 = vpop.f32.mrb[0].mxu0
    %456 = vmatprep.mubr.f32.mxu0 0.0
    %457 = vmatmul.mubr.f32.gmra.mrb[0].mxu0 %v160
    %v458 = vpop.f32.mrb[0].mxu0
    %v459 = vadd.f32 %v384, %v458
    %v460 = vpop.f32.mrb[0].mxu0
    %461 = vdwg.mxu0
    %v462 = vmax.f32 %v454, 0.0
    %v463 = vmax.f32 %v459, 0.0
    %v464 = vld [vmem:[%s3] sm:$0xff]
    %v465 = vld [vmem:[%s3 + $0x8] sm:$0xff]
    %v466 = vld [vmem:[%s3 + $0x10] sm:$0xff]
    %v467 = vld [vmem:[%s3 + $0x18] sm:$0xff]
    %v468 = vld [vmem:[%s3 + $0x20] sm:$0xff]
    %v469 = vld [vmem:[%s3 + $0x28] sm:$0xff]
    %v470 = vld [vmem:[%s3 + $0x30] sm:$0xff]
    %v471 = vld [vmem:[%s3 + $0x38] sm:$0xff]
    %v472 = vld [vmem:[%s3 + $0x40] sm:$0xff]
    %v473 = vld [vmem:[%s3 + $0x48] sm:$0xff]
    %v474 = vld [vmem:[%s3 + $0x50] sm:$0xff]
    %v475 = vld [vmem:[%s3 + $0x58] sm:$0xff]
    %v476 = vld [vmem:[%s3 + $0x60] sm:$0xff]
    %v477 = vld [vmem:[%s3 + $0x68] sm:$0xff]
    %v478 = vld [vmem:[%s3 + $0x70] sm:$0xff]
    %v479 = vld [vmem:[%s3 + $0x78] sm:$0xff]
    %v480 = vld [vmem:[#allocation2] sm:$0x1]
    %v482 = vlaneseq
    %v483 = vshrl.u32 %v482, 7
    %v484 = vsub.s32 0, %v483
    %v485 = vrot.slane %v480, %v484
    %487 = vmatprep.subr.mxu0 0.0
    %488 = vmatpush1.msra.mxu0 %v464
    %489 = vmatprep.subr.mxu0 0.0
    %490 = vmatpush1.msra.mxu0 %v465
    %491 = vmatprep.subr.mxu0 0.0
    %492 = vmatpush1.msra.mxu0 %v466
    %493 = vmatprep.subr.mxu0 0.0
    %494 = vmatpush1.msra.mxu0 %v467
    %495 = vmatprep.subr.mxu0 0.0
    %496 = vmatpush1.msra.mxu0 %v468
    %497 = vmatprep.subr.mxu0 0.0
    %498 = vmatpush1.msra.mxu0 %v469
    %499 = vmatprep.subr.mxu0 0.0
    %500 = vmatpush1.msra.mxu0 %v470
    %501 = vmatprep.subr.mxu0 0.0
    %502 = vmatpush1.msra.mxu0 %v471
    %503 = vmatprep.subr.mxu0 0.0
    %504 = vmatpush1.msra.mxu0 %v472
    %505 = vmatprep.subr.mxu0 0.0
    %506 = vmatpush1.msra.mxu0 %v473
    %507 = vmatprep.subr.mxu0 0.0
    %508 = vmatpush1.msra.mxu0 %v474
    %509 = vmatprep.subr.mxu0 0.0
    %510 = vmatpush1.msra.mxu0 %v475
    %511 = vmatprep.subr.mxu0 0.0
    %512 = vmatpush1.msra.mxu0 %v476
    %513 = vmatprep.subr.mxu0 0.0
    %514 = vmatpush1.msra.mxu0 %v477
    %515 = vmatprep.subr.mxu0 0.0
    %516 = vmatpush1.msra.mxu0 %v478
    %517 = vmatprep.subr.mxu0 0.0
    %518 = vmatpush1.msra.mxu0 %v479
    %519 = vmatprep.subr.mxu0 0.0
    %520 = vmatpush1.msra.mxu0 0.0
    %521 = vmatprep.subr.mxu0 0.0
    %522 = vmatpush1.msra.mxu0 0.0
    %523 = vmatprep.subr.mxu0 0.0
    %524 = vmatpush1.msra.mxu0 0.0
    %525 = vmatprep.subr.mxu0 0.0
    %526 = vmatpush1.msra.mxu0 0.0
    %527 = vmatprep.subr.mxu0 0.0
    %528 = vmatpush1.msra.mxu0 0.0
    %529 = vmatprep.subr.mxu0 0.0
    %530 = vmatpush1.msra.mxu0 0.0
    %531 = vmatprep.subr.mxu0 0.0
    %532 = vmatpush1.msra.mxu0 0.0
    %533 = vmatprep.subr.mxu0 0.0
    %534 = vmatpush1.msra.mxu0 0.0
    %535 = vmatprep.subr.mxu0 0.0
    %536 = vmatpush1.msra.mxu0 0.0
    %537 = vmatprep.subr.mxu0 0.0
    %538 = vmatpush1.msra.mxu0 0.0
    %539 = vmatprep.subr.mxu0 0.0
    %540 = vmatpush1.msra.mxu0 0.0
    %541 = vmatprep.subr.mxu0 0.0
    %542 = vmatpush1.msra.mxu0 0.0
    %543 = vmatprep.subr.mxu0 0.0
    %544 = vmatpush1.msra.mxu0 0.0
    %545 = vmatprep.subr.mxu0 0.0
    %546 = vmatpush1.msra.mxu0 0.0
    %547 = vmatprep.subr.mxu0 0.0
    %548 = vmatpush1.msra.mxu0 0.0
    %549 = vmatprep.subr.mxu0 0.0
    %550 = vmatpush1.msra.mxu0 0.0
    %551 = vmatprep.mubr.f32.mxu0 0.0
    %552 = vmatmul.mubr.f32.gmra.mrb[0].mxu0 %v462
    %v553 = vpop.f32.mrb[0].mxu0
    %v554 = vadd.f32 %v485, %v553
    %v555 = vpop.f32.mrb[0].mxu0
    %556 = vmatprep.mubr.f32.mxu0 0.0
    %557 = vmatmul.mubr.f32.gmra.mrb[0].mxu0 %v463
    %v558 = vpop.f32.mrb[0].mxu0
    %v559 = vadd.f32 %v485, %v558
    %v560 = vpop.f32.mrb[0].mxu0
    %561 = vdwg.mxu0
    %v562 = vsub.f32 0.0, %v554
    %v563 = vsub.f32 0.0, %v559
    %v564 = vmul.f32 %v562, 1.442695
    %v565 = vpow.pop %v564
    %v566 = vmul.f32 %v563, 1.442695
    %v567 = vpow.pop %v566
    %v568 = vadd.f32 %v565, 1.0
    %v569 = vadd.f32 %v567, 1.0
    %v570 = vrcp.pop %v568
    %v571 = vmul.f32 1.0, %v570
    %v572 = vrcp.pop %v569
    %v573 = vmul.f32 1.0, %v572
    %vm574 = vcmask 7168
    %575 = vst.msk [vmem:[%s5] sm:$0xff] %vm574, %v571
    %576 = vst.msk [vmem:[%s5 + $0x8] sm:$0xff] %vm574, %v573
    // Predicated region
    $region26: #{tpu_custom_call.1} parent=1 // pred_check
      _
    $region27: #{tpu_custom_call.1} parent=1 // pred_check_branch
      %578 = sbr.rel (0) target = $region29
    $region28: #{tpu_custom_call.1} parent=1 // pred_region
      _
    $region29: #{tpu_custom_call.1} parent=1 // pred_fallthru
      _
    // Predicated region
    $region30: #{tpu_custom_call.1} parent=1 // pred_check
      _
    $region31: #{tpu_custom_call.1} parent=1 // pred_check_branch
      %580 = sbr.rel (0) target = $region33
    $region32: #{tpu_custom_call.1} parent=1 // pred_region
      _
    $region33: #{tpu_custom_call.1} parent=1 // pred_fallthru
      _
    %581 = vsyncpa [#allocation4], 1

</llo_original>
